<compile_context>
chip_gen: v6e
topology: v6e:2x2x1
jax: 0.10.0
libtpu: 0.0.40
codegen_flags: <defaults>
</compile_context>

<pallas_src>
import functools

import numpy as np
import jax
import jax.numpy as jnp
from jax import lax
from jax.experimental import pallas as pl
from jax.experimental.pallas import tpu as pltpu

LN_EPS = 1e-5  # nn.LayerNorm default


# ----------------------------------------------------------------------------- helpers
def _round_up(x, m):
    return ((x + m - 1) // m) * m


def _row_tiling(m, max_tile=256):
    """Pick (padded_rows, tile_rows) so tile_rows divides padded_rows and is 8-aligned."""
    mp = _round_up(m, 8)
    if mp <= max_tile:
        return mp, mp
    mp = _round_up(mp, max_tile)
    return mp, max_tile


def _pad_rows(x, mp):
    if x.shape[0] == mp:
        return x
    pad = [(0, mp - x.shape[0])] + [(0, 0)] * (x.ndim - 1)
    return jnp.pad(x, pad)


def _cparams(n_grid_axes):
    return pltpu.CompilerParams(
        dimension_semantics=tuple(["parallel"] * n_grid_axes),
        vmem_limit_bytes=32 * 1024 * 1024,
    )


# ----------------------------------------------------------------------------- kernels
def _linear_kernel(x_ref, w_ref, b_ref, o_ref, *, activation):
    x = x_ref[...].astype(jnp.float32)
    w = w_ref[...].astype(jnp.float32)
    y = jnp.dot(x, w, preferred_element_type=jnp.float32)
    y = y + b_ref[...].astype(jnp.float32)
    if activation == "relu":
        y = jnp.maximum(y, 0.0)
    o_ref[...] = y.astype(o_ref.dtype)


def linear_pallas(x2d, w, b, activation=None):
    m, k = x2d.shape
    n = w.shape[1]
    mp, tm = _row_tiling(m)
    out = pl.pallas_call(
        functools.partial(_linear_kernel, activation=activation),
        out_shape=jax.ShapeDtypeStruct((mp, n), x2d.dtype),
        grid=(mp // tm,),
        in_specs=[
            pl.BlockSpec((tm, k), lambda i: (i, 0)),
            pl.BlockSpec((k, n), lambda i: (0, 0)),
            pl.BlockSpec((1, n), lambda i: (0, 0)),
        ],
        out_specs=pl.BlockSpec((tm, n), lambda i: (i, 0)),
        compiler_params=_cparams(1),
    )(_pad_rows(x2d, mp), w, b.reshape(1, n))
    return out[:m]


def _attention_kernel(q_ref, k_ref, v_ref, mask_ref, o_ref, *, temperature):
    q = q_ref[0].astype(jnp.float32)          # (L, dk)
    k = k_ref[0].astype(jnp.float32)          # (L, dk)
    v = v_ref[0].astype(jnp.float32)          # (L, dv)
    scores = lax.dot_general(q, k, (((1,), (1,)), ((), ())),
                             preferred_element_type=jnp.float32)
    scores = scores * (1.0 / temperature)
    pad = mask_ref[0]                         # (1, L) int32, 1 == padded key
    scores = jnp.where(pad > 0, -jnp.inf, scores)
    m = jnp.max(scores, axis=-1, keepdims=True)
    p = jnp.exp(scores - m)
    attn = p / jnp.sum(p, axis=-1, keepdims=True)
    o_ref[0] = jnp.dot(attn, v, preferred_element_type=jnp.float32).astype(o_ref.dtype)


def attention_pallas(qh, kh, vh, key_mask_b1l, n_head, temperature):
    bh, length, dk = qh.shape
    dv = vh.shape[-1]
    return pl.pallas_call(
        functools.partial(_attention_kernel, temperature=temperature),
        out_shape=jax.ShapeDtypeStruct((bh, length, dv), qh.dtype),
        grid=(bh,),
        in_specs=[
            pl.BlockSpec((1, length, dk), lambda i: (i, 0, 0)),
            pl.BlockSpec((1, length, dk), lambda i: (i, 0, 0)),
            pl.BlockSpec((1, length, dv), lambda i: (i, 0, 0)),
            pl.BlockSpec((1, 1, length), lambda i: (i // n_head, 0, 0)),
        ],
        out_specs=pl.BlockSpec((1, length, dv), lambda i: (i, 0, 0)),
        compiler_params=_cparams(1),
    )(qh, kh, vh, key_mask_b1l)


def _add_ln_mask_kernel(x_ref, r_ref, g_ref, b_ref, keep_ref, o_ref, *, eps):
    x = x_ref[...].astype(jnp.float32) + r_ref[...].astype(jnp.float32)
    mean = jnp.mean(x, axis=-1, keepdims=True)
    xc = x - mean
    var = jnp.mean(xc * xc, axis=-1, keepdims=True)
    y = xc * lax.rsqrt(var + eps)
    y = y * g_ref[...].astype(jnp.float32) + b_ref[...].astype(jnp.float32)
    y = y * keep_ref[...].astype(jnp.float32)   # masked_fill(mask, 0) == multiply by keep
    o_ref[...] = y.astype(o_ref.dtype)


def add_layernorm_mask_pallas(x2d, res2d, gamma, beta, keep2d):
    m, d = x2d.shape
    mp, tm = _row_tiling(m)
    out = pl.pallas_call(
        functools.partial(_add_ln_mask_kernel, eps=LN_EPS),
        out_shape=jax.ShapeDtypeStruct((mp, d), x2d.dtype),
        grid=(mp // tm,),
        in_specs=[
            pl.BlockSpec((tm, d), lambda i: (i, 0)),
            pl.BlockSpec((tm, d), lambda i: (i, 0)),
            pl.BlockSpec((1, d), lambda i: (0, 0)),
            pl.BlockSpec((1, d), lambda i: (0, 0)),
            pl.BlockSpec((tm, 1), lambda i: (i, 0)),
        ],
        out_specs=pl.BlockSpec((tm, d), lambda i: (i, 0)),
        compiler_params=_cparams(1),
    )(_pad_rows(x2d, mp), _pad_rows(res2d, mp),
      gamma.reshape(1, d), beta.reshape(1, d), _pad_rows(keep2d, mp))
    return out[:m]


def _conv1d_kernel(x_ref, w_ref, b_ref, o_ref, *, k_size, t_len, relu):
    x = x_ref[0].astype(jnp.float32)            # (T + k - 1, C_in), zero-padded time
    w = w_ref[...].astype(jnp.float32)          # (k, C_in, C_out)
    acc = jnp.zeros((t_len, w.shape[2]), jnp.float32) + b_ref[...].astype(jnp.float32)
    for j in range(k_size):                     # static unroll (small kernel size)
        acc = acc + jnp.dot(x[j:j + t_len, :], w[j],
                            preferred_element_type=jnp.float32)
    if relu:
        acc = jnp.maximum(acc, 0.0)
    o_ref[0] = acc.astype(o_ref.dtype)


def conv1d_pallas(x_btd, w_kio, bias, relu=False):
    b, t, c_in = x_btd.shape
    k, _, c_out = w_kio.shape
    assert k % 2 == 1, "same-padding Conv1d expects odd kernel_size"
    pad = (k - 1) // 2
    xp = jnp.pad(x_btd, ((0, 0), (pad, pad), (0, 0)))
    tp = t + 2 * pad
    return pl.pallas_call(
        functools.partial(_conv1d_kernel, k_size=k, t_len=t, relu=relu),
        out_shape=jax.ShapeDtypeStruct((b, t, c_out), x_btd.dtype),
        grid=(b,),
        in_specs=[
            pl.BlockSpec((1, tp, c_in), lambda i: (i, 0, 0)),
            pl.BlockSpec((k, c_in, c_out), lambda i: (0, 0, 0)),
            pl.BlockSpec((1, c_out), lambda i: (0, 0)),
        ],
        out_specs=pl.BlockSpec((1, t, c_out), lambda i: (i, 0, 0)),
        compiler_params=_cparams(1),
    )(xp, w_kio, bias.reshape(1, c_out))


def _embed_pos_kernel(ids_ref, table_ref, pos_ref, o_ref, *, vocab):
    ids = ids_ref[...]                                           # (M, 1) int32
    m = ids.shape[0]
    onehot = (ids == lax.broadcasted_iota(jnp.int32, (m, vocab), 1)).astype(jnp.float32)
    emb = jnp.dot(onehot, table_ref[...].astype(jnp.float32),
                  preferred_element_type=jnp.float32)
    o_ref[...] = (emb + pos_ref[...].astype(jnp.float32)).astype(o_ref.dtype)


def embed_pos_pallas(ids_flat, table, pos_slab):
    # TODO(synk): for production vocab sizes replace the one-hot matmul with a
    # scalar-prefetch row gather (PrefetchScalarGridSpec + pl.Element) so the full
    # embedding table never has to live in VMEM.
    m = ids_flat.shape[0]
    v, d = table.shape
    vmem = pl.BlockSpec(memory_space=pltpu.MemorySpace.VMEM)
    return pl.pallas_call(
        functools.partial(_embed_pos_kernel, vocab=v),
        out_shape=jax.ShapeDtypeStruct((m, d), jnp.float32),
        in_specs=[vmem, vmem, vmem],
        out_specs=vmem,
    )(ids_flat.reshape(m, 1).astype(jnp.int32), table, pos_slab)


def _fuse_mask_kernel(p_ref, s_ref, keep_ref, o_ref):
    x = p_ref[...].astype(jnp.float32) + s_ref[...].astype(jnp.float32)
    t = jnp.tanh(x)
    s = 1.0 / (1.0 + jnp.exp(-x))
    y = t * s * keep_ref[...].astype(jnp.float32)
    o_ref[...] = y.astype(o_ref.dtype)


def fuse_mask_pallas(p2d, s2d, keep2d):
    m, d = p2d.shape
    mp, tm = _row_tiling(m)
    out = pl.pallas_call(
        _fuse_mask_kernel,
        out_shape=jax.ShapeDtypeStruct((mp, d), p2d.dtype),
        grid=(mp // tm,),
        in_specs=[
            pl.BlockSpec((tm, d), lambda i: (i, 0)),
            pl.BlockSpec((tm, d), lambda i: (i, 0)),
            pl.BlockSpec((tm, 1), lambda i: (i, 0)),
        ],
        out_specs=pl.BlockSpec((tm, d), lambda i: (i, 0)),
        compiler_params=_cparams(1),
    )(_pad_rows(p2d, mp), _pad_rows(s2d, mp), _pad_rows(keep2d, mp))
    return out[:m]


# ----------------------------------------------------------------------------- model
def _fft_layer_forward(lp, x_btd, keep2d, key_mask_b1l):
    b, t, d = x_btd.shape
    h = lp["head_num"]
    dk = d // h
    m = b * t
    x2 = x_btd.reshape(m, d)

    q = linear_pallas(x2, lp["wq"], lp["bq"])
    k = linear_pallas(x2, lp["wk"], lp["bk"])
    v = linear_pallas(x2, lp["wv"], lp["bv"])

    def to_heads(a):   # (M, D) -> (B*H, T, dk), head-major channel split like PyTorch
        return a.reshape(b, t, h, dk).transpose(0, 2, 1, 3).reshape(b * h, t, dk)

    ctx = attention_pallas(to_heads(q), to_heads(k), to_heads(v),
                           key_mask_b1l, h, temperature=float(np.sqrt(dk)))
    ctx = ctx.reshape(b, h, t, dk).transpose(0, 2, 1, 3).reshape(m, d)

    proj = linear_pallas(ctx, lp["wo"], lp["bo"])
    # MHA epilogue: LayerNorm(fc(attn) + residual); FFT's masked_fill fused in.
    attn_out = add_layernorm_mask_pallas(proj, x2, lp["ln1_g"], lp["ln1_b"], keep2d)

    # Conv1DLayer: LN(w2(relu(w1(x))) + residual); FFT's masked_fill fused in.
    a3 = attn_out.reshape(b, t, d)
    c = conv1d_pallas(a3, lp["conv1_w"], lp["conv1_b"], relu=True)
    c = conv1d_pallas(c, lp["conv2_w"], lp["conv2_b"], relu=False)
    out = add_layernorm_mask_pallas(c.reshape(m, d), attn_out,
                                    lp["ln2_g"], lp["ln2_b"], keep2d)
    return out.reshape(b, t, d)


def _encoder_forward(enc, ids, keep2d, key_mask_b1l):
    b, t = ids.shape
    d = enc["embed"].shape[1]
    pos_slab = jnp.broadcast_to(enc["pos"][:t][None], (b, t, d)).reshape(b * t, d)
    x = embed_pos_pallas(ids.reshape(-1), enc["embed"], pos_slab).reshape(b, t, d)
    for lp in enc["layers"]:
        x = _fft_layer_forward(lp, x, keep2d, key_mask_b1l)
    return x


def context_encoder_forward(params, x_ids, s_ids, x_lens, language=None):
    """JAX/Pallas equivalent of ContextEncoder.forward (inference; dropout = identity).

    `language` is accepted for signature parity; as in the PyTorch forward, neither
    the language encoder nor the final fc/LeakyReLU are invoked.
    """
    del language
    b, t = x_ids.shape
    pad_mask = jnp.arange(t, dtype=jnp.int32)[None, :] >= x_lens[:, None]  # True == padded
    keep2d = jnp.logical_not(pad_mask).astype(jnp.float32).reshape(b * t, 1)
    key_mask_b1l = pad_mask.astype(jnp.int32).reshape(b, 1, t)

    pho = _encoder_forward(params["pho"], x_ids, keep2d, key_mask_b1l)
    style = _encoder_forward(params["style"], s_ids, keep2d, key_mask_b1l)

    d = pho.shape[-1]
    fused = fuse_mask_pallas(pho.reshape(b * t, d), style.reshape(b * t, d), keep2d)
    return fused.reshape(b, t, d)


# ----------------------------------------------------------------------------- params
def sinusoid_encoding_table(seq_len, d_hid):
    pos = np.arange(seq_len)[:, None].astype(np.float64)
    hid = np.arange(d_hid)[None, :]
    table = pos / np.power(10000.0, 2.0 * (hid // 2) / d_hid)
    table[:, 0::2] = np.sin(table[:, 0::2])
    table[:, 1::2] = np.cos(table[:, 1::2])
    return jnp.asarray(table, dtype=jnp.float32)


def _dense(key, d_in, d_out, scale=0.08):
    kw, kb = jax.random.split(key)
    return (jax.random.normal(kw, (d_in, d_out), jnp.float32) * scale,
            jax.random.normal(kb, (d_out,), jnp.float32) * scale)


def _init_fft_layer(key, cfg):
    d, f, k = cfg["hidden_dim"], cfg["filter_num"], cfg["kernel_size"]
    keys = jax.random.split(key, 8)
    wq, bq = _dense(keys[0], d, d)
    wk, bk = _dense(keys[1], d, d)
    wv, bv = _dense(keys[2], d, d)
    wo, bo = _dense(keys[3], d, d)
    c1w = jax.random.normal(keys[4], (k, d, f), jnp.float32) * 0.08
    c1b = jax.random.normal(keys[5], (f,), jnp.float32) * 0.08
    c2w = jax.random.normal(keys[6], (k, f, d), jnp.float32) * 0.08
    c2b = jax.random.normal(keys[7], (d,), jnp.float32) * 0.08
    return dict(head_num=cfg["head_num"],
                wq=wq, bq=bq, wk=wk, bk=bk, wv=wv, bv=bv, wo=wo, bo=bo,
                conv1_w=c1w, conv1_b=c1b, conv2_w=c2w, conv2_b=c2b,
                ln1_g=jnp.ones((d,), jnp.float32), ln1_b=jnp.zeros((d,), jnp.float32),
                ln2_g=jnp.ones((d,), jnp.float32), ln2_b=jnp.zeros((d,), jnp.float32))


def _init_encoder(key, cfg, max_word):
    v, d = cfg["word_num"], cfg["word_dim"]
    k_emb, k_layers = jax.random.split(key)
    embed = jax.random.normal(k_emb, (v, d), jnp.float32) * 0.1
    embed = embed.at[cfg["padding_idx"]].set(0.0)     # nn.Embedding padding_idx row
    layer_keys = jax.random.split(k_layers, cfg["n_layers"])
    layers = [_init_fft_layer(lk, cfg["FFT"]) for lk in layer_keys]
    return dict(embed=embed, pos=sinusoid_encoding_table(max_word, d), layers=layers)


def init_context_encoder(key, config):
    max_word = config["max_seq_len"] + 1
    k1, k2 = jax.random.split(key)
    return {"pho": _init_encoder(k1, config["pho_config"], max_word),
            "style": _init_encoder(k2, config["style_config"], max_word)}


# ----------------------------------------------------------------------------- pure-JAX reference
def _ref_layernorm(x, g, b):
    mean = x.mean(-1, keepdims=True)
    var = ((x - mean) ** 2).mean(-1, keepdims=True)
    return (x - mean) / jnp.sqrt(var + LN_EPS) * g + b


def _ref_conv1d(x, w, bias):
    k = w.shape[0]
    pad = (k - 1) // 2
    t = x.shape[1]
    xp = jnp.pad(x, ((0, 0), (pad, pad), (0, 0)))
    out = bias
    for j in range(k):
        out = out + jnp.einsum("bti,io->bto", xp[:, j:j + t, :], w[j])
    return out


def _ref_encoder(enc, ids, pad_mask):
    b, t = ids.shape
    d = enc["embed"].shape[1]
    x = jnp.take(enc["embed"], ids, axis=0) + enc["pos"][:t][None]
    keep = jnp.logical_not(pad_mask).astype(jnp.float32)[:, :, None]
    for lp in enc["layers"]:
        h = lp["head_num"]
        dk = d // h

        def proj(w, bb, x=x):
            return (x.reshape(b * t, d) @ w + bb).reshape(b, t, h, dk).transpose(0, 2, 1, 3)

        q, k_, v = proj(lp["wq"], lp["bq"]), proj(lp["wk"], lp["bk"]), proj(lp["wv"], lp["bv"])
        scores = jnp.einsum("bhqd,bhkd->bhqk", q, k_) / np.sqrt(dk)
        scores = jnp.where(pad_mask[:, None, None, :], -jnp.inf, scores)
        attn = jax.nn.softmax(scores, axis=-1)
        ctx = jnp.einsum("bhqk,bhkd->bhqd", attn, v).transpose(0, 2, 1, 3).reshape(b, t, d)
        proj_o = (ctx.reshape(b * t, d) @ lp["wo"] + lp["bo"]).reshape(b, t, d)
        h1 = _ref_layernorm(proj_o + x, lp["ln1_g"], lp["ln1_b"]) * keep
        c = jnp.maximum(_ref_conv1d(h1, lp["conv1_w"], lp["conv1_b"]), 0.0)
        c = _ref_conv1d(c, lp["conv2_w"], lp["conv2_b"])
        x = _ref_layernorm(c + h1, lp["ln2_g"], lp["ln2_b"]) * keep
    return x


def _ref_context_encoder(params, x_ids, s_ids, x_lens):
    b, t = x_ids.shape
    pad_mask = jnp.arange(t)[None, :] >= x_lens[:, None]
    pho = _ref_encoder(params["pho"], x_ids, pad_mask)
    style = _ref_encoder(params["style"], s_ids, pad_mask)
    z = pho + style
    fused = jnp.tanh(z) * jax.nn.sigmoid(z)
    return fused * jnp.logical_not(pad_mask)[:, :, None].astype(fused.dtype)


# ----------------------------------------------------------------------------- main
if __name__ == "__main__":
    key = jax.random.PRNGKey(0)
    B, T, D = 2, 16, 32
    fft_cfg = {"hidden_dim": D, "filter_num": 64, "kernel_size": 3,
               "dropout": 0.1, "head_num": 2}
    config = {
        "max_seq_len": 32,
        "pho_config": {"word_num": 40, "word_dim": D, "padding_idx": 0,
                       "n_layers": 1, "FFT": dict(fft_cfg)},
        "style_config": {"word_num": 9, "word_dim": D, "padding_idx": 0,
                         "n_layers": 1, "FFT": dict(fft_cfg)},
    }

    kp, kx, ks = jax.random.split(key, 3)
    params = init_context_encoder(kp, config)

    x_ids = jax.random.randint(kx, (B, T), 1, config["pho_config"]["word_num"], dtype=jnp.int32)
    s_ids = jax.random.randint(ks, (B, T), 1, config["style_config"]["word_num"], dtype=jnp.int32)
    x_lens = jnp.array([T, 11], dtype=jnp.int32)
    language = jnp.zeros((B,), dtype=jnp.int32)   # accepted but unused (parity with PyTorch)

    fused = context_encoder_forward(params, x_ids, s_ids, x_lens, language)
    jax.block_until_ready(fused)

    ref = _ref_context_encoder(params, x_ids, s_ids, x_lens)
    err = float(jnp.max(jnp.abs(fused - ref)))
    assert err < 5e-4, f"max abs err {err}"

    print("KERNEL_OK")
</pallas_src>

<mosaic_0001>
module attributes {stable_mosaic.version = 11 : i64} {
  func.func @_embed_pos_kernel(%arg0: memref<32x1xi32, #tpu.memory_space<vmem>>, %arg1: memref<40x32xf32, #tpu.memory_space<vmem>>, %arg2: memref<32x32xf32, #tpu.memory_space<vmem>>, %arg3: memref<32x32xf32, #tpu.memory_space<vmem>>) attributes {dimension_semantics = [], scalar_prefetch = 0 : i64, scratch_operands = 0 : i64, tpu.core_type = #tpu.core_type<tc>} {
    %c0 = arith.constant 0 : index
    %c0_0 = arith.constant 0 : index
    %0 = vector.load %arg0[%c0, %c0_0] : memref<32x1xi32, #tpu.memory_space<vmem>>, vector<32x1xi32>
    %1 = tpu.iota {dimensions = array<i32: 1>} : vector<32x40xi32>
    %2 = vector.broadcast %0 : vector<32x1xi32> to vector<32x40xi32>
    %3 = arith.cmpi eq, %2, %1 : vector<32x40xi32>
    %4 = arith.extui %3 : vector<32x40xi1> to vector<32x40xi32>
    %5 = arith.sitofp %4 : vector<32x40xi32> to vector<32x40xf32>
    %c0_1 = arith.constant 0 : index
    %c0_2 = arith.constant 0 : index
    %6 = vector.load %arg1[%c0_1, %c0_2] : memref<40x32xf32, #tpu.memory_space<vmem>>, vector<40x32xf32>
    %cst = arith.constant dense<0.000000e+00> : vector<32x32xf32>
    %7 = tpu.matmul %5, %6, %cst {dimension_numbers = #tpu.dot_dimension_numbers<[1], [0], [0], [1], [0, 0, 1, 1], [], []>} : vector<32x40xf32>, vector<40x32xf32>, vector<32x32xf32> -> vector<32x32xf32>
    %c0_3 = arith.constant 0 : index
    %c0_4 = arith.constant 0 : index
    %8 = vector.load %arg2[%c0_3, %c0_4] : memref<32x32xf32, #tpu.memory_space<vmem>>, vector<32x32xf32>
    %9 = arith.addf %7, %8 : vector<32x32xf32>
    %c0_5 = arith.constant 0 : index
    %c0_6 = arith.constant 0 : index
    %10 = vector.load %arg3[%c0_5, %c0_6] : memref<32x32xf32, #tpu.memory_space<vmem>>, vector<32x32xf32>
    tpu.vector_store %arg3[%c0_5, %c0_6], %9 {strides = array<i32>} : memref<32x32xf32, #tpu.memory_space<vmem>>, vector<32x32xf32>,
    return
  }
}

</mosaic_0001>

<llo_original>
// kernel: tpu_custom_call.1
$region0: #{tpu_custom_call.1}
  #allocation0 [shape = 'u32[]', space=smem, size = 0x4, offset = 0x4, fixed_abs, tag = 'smem constant byte address 0x4 - core index']
  #allocation1 [shape = 'u32[144,128]{1,0:T(1,128)}', space=vmem, size = 0x12000, scoped, tag = 'internal scratch']
  %s0 = inlined_call_operand.vmem [shape: s32[32,1], index: 0, kind: input, shape index: {}]
  %s1 = inlined_call_operand.vmem [shape: f32[40,32], index: 1, kind: input, shape index: {}]
  %s2 = inlined_call_operand.vmem [shape: f32[32,32], index: 2, kind: input, shape index: {}]
  %s3 = inlined_call_operand.hbm [shape: f32[32,32], index: 3, kind: output, shape index: {}]
  %s4 = sld [smem:[#allocation0]]
  $region22: #{tpu_custom_call.1} parent=0
    _
  %s6 = ssub.s32 1, %s4
  %s7 = scalar_select 0, %s6, %s4
  $region1: #{tpu_custom_call.1} parent=0
    #allocation2 [shape = 'u8[16384]{0}', space=vmem, size = 0x4000, scoped, tag = 'output window, operand 0, single buffered']
    #allocation3 [shape = 's32[1]{0}', space=sflag, size = 0x4, scoped, tag = 'scoped memory for tpu_custom_call.1']
    %8 = vsyncpa [#allocation3], 0
    // Predicated region
    $region2: #{tpu_custom_call.1} parent=1 // pred_check
      _
    $region3: #{tpu_custom_call.1} parent=1 // pred_check_branch
      %10 = sbr.rel (0) target = $region5
    $region4: #{tpu_custom_call.1} parent=1 // pred_region
      _
    $region5: #{tpu_custom_call.1} parent=1 // pred_fallthru
      _
    // Predicated region
    $region6: #{tpu_custom_call.1} parent=1 // pred_check
      _
    $region7: #{tpu_custom_call.1} parent=1 // pred_check_branch
      %12 = sbr.rel (0) target = $region9
    $region8: #{tpu_custom_call.1} parent=1 // pred_region
      _
    $region9: #{tpu_custom_call.1} parent=1 // pred_fallthru
      _
    // Predicated region
    $region10: #{tpu_custom_call.1} parent=1 // pred_check
      _
    $region11: #{tpu_custom_call.1} parent=1 // pred_check_branch
      %14 = sbr.rel (0) target = $region13
    $region12: #{tpu_custom_call.1} parent=1 // pred_region
      _
    $region13: #{tpu_custom_call.1} parent=1 // pred_fallthru
      _
    %v15 = vld [vmem:[%s0] sm:$0xff]
    %v16 = vld [vmem:[%s0 + $0x8] sm:$0xff]
    %v17 = vld [vmem:[%s0 + $0x10] sm:$0xff]
    %v18 = vld [vmem:[%s0 + $0x18] sm:$0xff]
    %v19 = vlaneseq
    %v20 = vand.u32 %v19, 127
    %21 = vset.pattern.permute.xlu0 0
    %22 = vperm.xlu0 %21, %v15
    %v23 = vpop.permute.xlu0 %22
    %24 = vset.pattern.permute.xlu0 0
    %25 = vperm.xlu0 %24, %v16
    %v26 = vpop.permute.xlu0 %25
    %27 = vset.pattern.permute.xlu0 0
    %28 = vperm.xlu0 %27, %v17
    %v29 = vpop.permute.xlu0 %28
    %30 = vset.pattern.permute.xlu0 0
    %31 = vperm.xlu0 %30, %v18
    %v32 = vpop.permute.xlu0 %31
    %vm33 = vcmp.eq.s32.totalorder %v23, %v20
    %vm34 = vcmp.eq.s32.totalorder %v26, %v20
    %vm35 = vcmp.eq.s32.totalorder %v29, %v20
    %vm36 = vcmp.eq.s32.totalorder %v32, %v20
    %v37 = vsel %vm33, 1, 0
    %v38 = vsel %vm34, 1, 0
    %v39 = vsel %vm35, 1, 0
    %v40 = vsel %vm36, 1, 0
    %v41 = vcvt.s32.f32 %v37
    %v42 = vcvt.s32.f32 %v38
    %v43 = vcvt.s32.f32 %v39
    %v44 = vcvt.s32.f32 %v40
    %v45 = vld [vmem:[%s1] sm:$0xff]
    %v46 = vld [vmem:[%s1 + $0x8] sm:$0xff]
    %v47 = vld [vmem:[%s1 + $0x10] sm:$0xff]
    %v48 = vld [vmem:[%s1 + $0x18] sm:$0xff]
    %v49 = vld [vmem:[%s1 + $0x20] sm:$0xff]
    %v50 = vld [vmem:[%s2] sm:$0xff]
    %v51 = vld [vmem:[%s2 + $0x8] sm:$0xff]
    %v52 = vld [vmem:[%s2 + $0x10] sm:$0xff]
    %v53 = vld [vmem:[%s2 + $0x18] sm:$0xff]
    %vm54 = vcmask 326656
    %v56 = vsel %vm54, %v41, 0
    %v59 = vsel %vm54, %v42, 0
    %v62 = vsel %vm54, %v43, 0
    %v65 = vsel %vm54, %v44, 0
    %67 = vmatprep.subr.mxu0 0.0
    %68 = vmatpush1.msra.mxu0 0.0
    %69 = vmatprep.subr.mxu0 0.0
    %70 = vmatpush1.msra.mxu0 0.0
    %71 = vmatprep.subr.mxu0 0.0
    %72 = vmatpush1.msra.mxu0 0.0
    %73 = vmatprep.subr.mxu0 0.0
    %74 = vmatpush1.msra.mxu0 0.0
    %75 = vmatprep.subr.mxu0 0.0
    %76 = vmatpush1.msra.mxu0 0.0
    %77 = vmatprep.subr.mxu0 0.0
    %78 = vmatpush1.msra.mxu0 0.0
    %79 = vmatprep.subr.mxu0 0.0
    %80 = vmatpush1.msra.mxu0 0.0
    %81 = vmatprep.subr.mxu0 0.0
    %82 = vmatpush1.msra.mxu0 0.0
    %83 = vmatprep.subr.mxu0 0.0
    %84 = vmatpush1.msra.mxu0 0.0
    %85 = vmatprep.subr.mxu0 0.0
    %86 = vmatpush1.msra.mxu0 0.0
    %87 = vmatprep.subr.mxu0 0.0
    %88 = vmatpush1.msra.mxu0 0.0
    %89 = vmatprep.subr.mxu0 0.0
    %90 = vmatpush1.msra.mxu0 %v49
    %91 = vmatprep.subr.mxu0 0.0
    %92 = vmatpush1.msra.mxu0 %v48
    %93 = vmatprep.subr.mxu0 0.0
    %94 = vmatpush1.msra.mxu0 %v47
    %95 = vmatprep.subr.mxu0 0.0
    %96 = vmatpush1.msra.mxu0 %v46
    %97 = vmatprep.subr.mxu0 0.0
    %98 = vmatpush1.msra.mxu0 %v45
    %99 = vmatprep.subr.mxu0 0.0
    %100 = vmatpush2.msra.mxu0 0.0
    %101 = vmatprep.subr.mxu0 0.0
    %102 = vmatpush2.msra.mxu0 0.0
    %103 = vmatprep.subr.mxu0 0.0
    %104 = vmatpush2.msra.mxu0 0.0
    %105 = vmatprep.subr.mxu0 0.0
    %106 = vmatpush2.msra.mxu0 0.0
    %107 = vmatprep.subr.mxu0 0.0
    %108 = vmatpush2.msra.mxu0 0.0
    %109 = vmatprep.subr.mxu0 0.0
    %110 = vmatpush2.msra.mxu0 0.0
    %111 = vmatprep.subr.mxu0 0.0
    %112 = vmatpush2.msra.mxu0 0.0
    %113 = vmatprep.subr.mxu0 0.0
    %114 = vmatpush2.msra.mxu0 0.0
    %115 = vmatprep.subr.mxu0 0.0
    %116 = vmatpush2.msra.mxu0 0.0
    %117 = vmatprep.subr.mxu0 0.0
    %118 = vmatpush2.msra.mxu0 0.0
    %119 = vmatprep.subr.mxu0 0.0
    %120 = vmatpush2.msra.mxu0 0.0
    %121 = vmatprep.subr.mxu0 0.0
    %122 = vmatpush2.msra.mxu0 0.0
    %123 = vmatprep.subr.mxu0 0.0
    %124 = vmatpush2.msra.mxu0 0.0
    %125 = vmatprep.subr.mxu0 0.0
    %126 = vmatpush2.msra.mxu0 0.0
    %127 = vmatprep.subr.mxu0 0.0
    %128 = vmatpush2.msra.mxu0 0.0
    %129 = vmatprep.subr.mxu0 0.0
    %130 = vmatpush2.msra.mxu0 0.0
    %131 = vmatprep.mubr.f32.mxu0 0.0
    %132 = vmatmul.mubr.f32.gmra.mxu0 %v56
    %v133 = vpop.f32.mrf.mxu0
    %v134 = vadd.f32 %v50, %v133
    %v135 = vpop.f32.mrf.mxu0
    %136 = vmatprep.mubr.f32.mxu0 0.0
    %137 = vmatmul.mubr.f32.gmra.mxu0 %v59
    %v138 = vpop.f32.mrf.mxu0
    %v139 = vadd.f32 %v51, %v138
    %v140 = vpop.f32.mrf.mxu0
    %141 = vmatprep.mubr.f32.mxu0 0.0
    %142 = vmatmul.mubr.f32.gmra.mxu0 %v62
    %v143 = vpop.f32.mrf.mxu0
    %v144 = vadd.f32 %v52, %v143
    %v145 = vpop.f32.mrf.mxu0
    %146 = vmatprep.mubr.f32.mxu0 0.0
    %147 = vmatmul.mubr.f32.gmra.mxu0 %v65
    %v148 = vpop.f32.mrf.mxu0
    %v149 = vadd.f32 %v53, %v148
    %v150 = vpop.f32.mrf.mxu0
    %151 = vdwg.mxu0
    %vm152 = vcmask 261120
    %153 = vst.msk [vmem:[#allocation2] sm:$0xff] %vm152, %v134
    %154 = vst.msk [vmem:[#allocation2 + $0x8] sm:$0xff] %vm152, %v139
    %155 = vst.msk [vmem:[#allocation2 + $0x10] sm:$0xff] %vm152, %v144
    %156 = vst.msk [vmem:[#allocation2 + $0x18] sm:$0xff] %vm152, %v149
    // Predicated region
    $region14: #{tpu_custom_call.1} parent=1 // pred_check
      _
    $region15: #{tpu_custom_call.1} parent=1 // pred_check_branch
      %158 = sbr.rel (0) target = $region17
    $region16: #{tpu_custom_call.1} parent=1 // pred_region
      %s160 = ssub.s32 512, 512
      %161 = vsyncadd [#allocation3], %s160
      %s162 = sshll.u32 [#allocation2], 4
      %s163 = int_to_ptr.vmem [resolvable:$true] %s162
      %168 = dma.vmem_to_hbm [thread:$0]  %s163, 512, %s3, [#allocation3], 128, 128, 8
    $region17: #{tpu_custom_call.1} parent=1 // pred_fallthru
      _
    // Predicated region
    $region18: #{tpu_custom_call.1} parent=1 // pred_check
      _
    $region19: #{tpu_custom_call.1} parent=1 // pred_check_branch
      %170 = sbr.rel (0) target = $region21
    $region20: #{tpu_custom_call.1} parent=1 // pred_region
      %171 = dma.done [#allocation3], 512
    $region21: #{tpu_custom_call.1} parent=1 // pred_fallthru
      _
    %172 = vsyncpa [#allocation3], 1

</llo_original>
